<compile_context>
chip_gen: v7x
topology: tpu7x:2x2x1
jax: 0.10.0
libtpu: 0.0.40
codegen_flags: <defaults>
</compile_context>

<pallas_src>
import functools
import math

import jax
import jax.numpy as jnp
from jax.experimental import pallas as pl
from jax.experimental.pallas import tpu as pltpu


def gal_kernel(f1_ref, f2_ref, w1_ref, w2_ref, o_ref, *, gated_dim, tanh_dtype):
    G = gated_dim

    # Two fused MXU matmuls, f32 accumulation:
    #   r1 = f1 @ [WF1 | WFa] -> [TM, 2G],  r2 = f2 @ [WF2 | WFb] -> [TM, 2G]
    r1 = jnp.dot(f1_ref[...], w1_ref[...], preferred_element_type=jnp.float32)
    r2 = jnp.dot(f2_ref[...], w2_ref[...], preferred_element_type=jnp.float32)

    # Static, lane-aligned column slices (G = 128 -> tile-aligned, cheap).
    # tanh runs on the EUP; on v6e/v7x with bf16 I/O the bf16 EUP path doubles throughput.
    h1 = jnp.tanh(r1[:, :G].astype(tanh_dtype)).astype(jnp.float32)
    h2 = jnp.tanh(r2[:, :G].astype(tanh_dtype)).astype(jnp.float32)

    # Row-wise softmax over the gated dimension (f32 internals).
    s = r1[:, G:] + r2[:, G:]                     # == concat([f1, f2], 1) @ WF
    s_max = jnp.max(s, axis=-1, keepdims=True)
    e = jnp.exp(s - s_max)
    denom = jnp.sum(e, axis=-1, keepdims=True)
    z = e * pl.reciprocal(denom, approx=True)     # EUP vrcp — effectively free

    # z*h1 + (1-z)*h2  ==  h2 + z*(h1 - h2)   (one fewer multiply)
    o_ref[...] = (h2 + z * (h1 - h2)).astype(o_ref.dtype)


def fuse_gal_weights(wf1, wf2, wf, dtype=None):
    """One-time weight prep: lane-concat the gate columns onto each branch."""
    D1 = wf1.shape[0]
    w1_fused = jnp.concatenate([wf1, wf[:D1]], axis=1)   # [D1, 2G]
    w2_fused = jnp.concatenate([wf2, wf[D1:]], axis=1)   # [D2, 2G]
    if dtype is not None:
        w1_fused = w1_fused.astype(dtype)
        w2_fused = w2_fused.astype(dtype)
    return w1_fused, w2_fused


def _round_up(x, m):
    return ((x + m - 1) // m) * m


def _bf16_eup_ok():
    """bf16 transcendental path exists on v6e/v7x but not v5e and earlier."""
    try:
        kind = jax.devices()[0].device_kind.lower()
    except Exception:
        return False
    return not any(tag in kind for tag in ("v2", "v3", "v4", "v5"))


def gal_forward(f1, f2, w1_fused, w2_fused, *, block_b=None,
                block_b_cap=512, min_grid_steps=4):
    B, D1 = f1.shape
    _, D2 = f2.shape
    G2 = w1_fused.shape[1]
    G = G2 // 2

    io_dtype = f1.dtype
    # bf16 packs 16 rows per sublane tile; f32 packs 8.
    align = 16 if io_dtype == jnp.bfloat16 else 8

    # Batch tile: aim for >= `min_grid_steps` grid steps (pipelining + megacore sharding),
    # capped at 512 rows (mem-bound roofline is saturated by ~512, keeps VMEM small on v5e,
    # and bounds padded-row DMA waste).
    if block_b is None:
        block_b = _round_up(max(1, -(-B // min_grid_steps)), align)
        block_b = max(align, min(block_b, block_b_cap))
    block_b = _round_up(block_b, align)

    Bp = _round_up(B, block_b)
    if Bp != B:
        pad = Bp - B
        # Zero-padded rows are harmless (tanh(0)=0, uniform softmax -> out 0); sliced off below.
        f1 = jnp.pad(f1, ((0, pad), (0, 0)))
        f2 = jnp.pad(f2, ((0, pad), (0, 0)))

    tanh_dtype = jnp.float32
    if io_dtype == jnp.bfloat16 and _bf16_eup_ok():
        tanh_dtype = jnp.bfloat16

    grid = (Bp // block_b,)

    out = pl.pallas_call(
        functools.partial(gal_kernel, gated_dim=G, tanh_dtype=tanh_dtype),
        out_shape=jax.ShapeDtypeStruct((Bp, G), io_dtype),
        grid=grid,
        in_specs=[
            pl.BlockSpec((block_b, D1), lambda i: (i, 0)),   # f1: streamed over batch
            pl.BlockSpec((block_b, D2), lambda i: (i, 0)),   # f2: streamed over batch
            pl.BlockSpec((D1, G2), lambda i: (0, 0)),        # fused weights: VMEM-resident
            pl.BlockSpec((D2, G2), lambda i: (0, 0)),
        ],
        out_specs=pl.BlockSpec((block_b, G), lambda i: (i, 0)),
        compiler_params=pltpu.CompilerParams(
            dimension_semantics=("parallel",)),
    )(f1, f2, w1_fused, w2_fused)

    return out[:B]


def xavier_uniform(key, shape, dtype=jnp.float32):
    fan_in, fan_out = shape
    bound = math.sqrt(6.0 / (fan_in + fan_out))
    return jax.random.uniform(key, shape, dtype=dtype, minval=-bound, maxval=bound)


def gal_reference(f1, f2, wf1, wf2, wf):
    h1 = jnp.tanh(f1 @ wf1)
    h2 = jnp.tanh(f2 @ wf2)
    z = jax.nn.softmax(jnp.concatenate([f1, f2], axis=1) @ wf, axis=1)
    return z * h1 + (1.0 - z) * h2


if __name__ == "__main__":
    # Small shapes consistent with the module: batch=8, D1=32, D2=48, gated_dim=128.
    B, D1, D2, G = 8, 32, 48, 128

    key = jax.random.PRNGKey(0)
    k1, k2, k3, k4, k5 = jax.random.split(key, 5)

    f1 = jax.random.normal(k1, (B, D1), dtype=jnp.float32)
    f2 = jax.random.normal(k2, (B, D2), dtype=jnp.float32)
    WF1 = xavier_uniform(k3, (D1, G))
    WF2 = xavier_uniform(k4, (D2, G))
    WF = xavier_uniform(k5, (D1 + D2, G))

    ref = gal_reference(f1, f2, WF1, WF2, WF)

    # --- f32 path (tight numeric check; approx reciprocal -> ~1e-3 tolerance) ---
    W1f, W2f = fuse_gal_weights(WF1, WF2, WF)
    out_f32 = jax.block_until_ready(gal_forward(f1, f2, W1f, W2f))
    assert out_f32.shape == (B, G)
    assert jnp.allclose(out_f32, ref, atol=1e-3, rtol=1e-3), \
        float(jnp.max(jnp.abs(out_f32 - ref)))

    # --- bf16 I/O path (recommended production default: halves HBM traffic) ---
    W1f_bf, W2f_bf = fuse_gal_weights(WF1, WF2, WF, dtype=jnp.bfloat16)
    out_bf16 = jax.block_until_ready(
        gal_forward(f1.astype(jnp.bfloat16), f2.astype(jnp.bfloat16), W1f_bf, W2f_bf))
    assert out_bf16.shape == (B, G)
    assert jnp.allclose(out_bf16.astype(jnp.float32), ref, atol=4e-2, rtol=4e-2), \
        float(jnp.max(jnp.abs(out_bf16.astype(jnp.float32) - ref)))

    print("KERNEL_OK")
</pallas_src>

<mosaic_0001>
module attributes {stable_mosaic.version = 11 : i64} {
  func.func @gal_kernel(%arg0: i32, %arg1: memref<8x32xf32, #tpu.memory_space<vmem>>, %arg2: memref<8x48xf32, #tpu.memory_space<vmem>>, %arg3: memref<32x256xf32, #tpu.memory_space<vmem>>, %arg4: memref<48x256xf32, #tpu.memory_space<vmem>>, %arg5: memref<8x128xf32, #tpu.memory_space<vmem>>) attributes {dimension_semantics = [#tpu.dimension_semantics<parallel>], iteration_bounds = array<i64: 1>, scalar_prefetch = 0 : i64, scratch_operands = 0 : i64, tpu.core_type = #tpu.core_type<tc>, window_params = [{transform_indices = @transform_0, window_bounds = array<i64: 8, 32>}, {transform_indices = @transform_1, window_bounds = array<i64: 8, 48>}, {pipeline_mode = #tpu.pipeline_mode<synchronous>, transform_indices = @transform_2, window_bounds = array<i64: 32, 256>}, {pipeline_mode = #tpu.pipeline_mode<synchronous>, transform_indices = @transform_3, window_bounds = array<i64: 48, 256>}, {transform_indices = @transform_4, window_bounds = array<i64: 8, 128>}]} {
    %c0 = arith.constant 0 : index
    %c0_0 = arith.constant 0 : index
    %0 = vector.load %arg1[%c0, %c0_0] : memref<8x32xf32, #tpu.memory_space<vmem>>, vector<8x32xf32>
    %c0_1 = arith.constant 0 : index
    %c0_2 = arith.constant 0 : index
    %1 = vector.load %arg3[%c0_1, %c0_2] : memref<32x256xf32, #tpu.memory_space<vmem>>, vector<32x256xf32>
    %cst = arith.constant dense<0.000000e+00> : vector<8x256xf32>
    %2 = tpu.matmul %0, %1, %cst {dimension_numbers = #tpu.dot_dimension_numbers<[1], [0], [0], [1], [0, 0, 1, 1], [], []>} : vector<8x32xf32>, vector<32x256xf32>, vector<8x256xf32> -> vector<8x256xf32>
    %c0_3 = arith.constant 0 : index
    %c0_4 = arith.constant 0 : index
    %3 = vector.load %arg2[%c0_3, %c0_4] : memref<8x48xf32, #tpu.memory_space<vmem>>, vector<8x48xf32>
    %c0_5 = arith.constant 0 : index
    %c0_6 = arith.constant 0 : index
    %4 = vector.load %arg4[%c0_5, %c0_6] : memref<48x256xf32, #tpu.memory_space<vmem>>, vector<48x256xf32>
    %cst_7 = arith.constant dense<0.000000e+00> : vector<8x256xf32>
    %5 = tpu.matmul %3, %4, %cst_7 {dimension_numbers = #tpu.dot_dimension_numbers<[1], [0], [0], [1], [0, 0, 1, 1], [], []>} : vector<8x48xf32>, vector<48x256xf32>, vector<8x256xf32> -> vector<8x256xf32>
    %6 = vector.extract_strided_slice %2 {offsets = [0, 0], sizes = [8, 128], strides = [1, 1]} : vector<8x256xf32> to vector<8x128xf32>
    %7 = math.tanh %6 : vector<8x128xf32>
    %8 = vector.extract_strided_slice %5 {offsets = [0, 0], sizes = [8, 128], strides = [1, 1]} : vector<8x256xf32> to vector<8x128xf32>
    %9 = math.tanh %8 : vector<8x128xf32>
    %10 = vector.extract_strided_slice %2 {offsets = [0, 128], sizes = [8, 128], strides = [1, 1]} : vector<8x256xf32> to vector<8x128xf32>
    %11 = vector.extract_strided_slice %5 {offsets = [0, 128], sizes = [8, 128], strides = [1, 1]} : vector<8x256xf32> to vector<8x128xf32>
    %12 = arith.addf %10, %11 : vector<8x128xf32>
    %cst_8 = arith.constant dense<0xFF800000> : vector<8xf32>
    %13 = vector.multi_reduction <maximumf>, %12, %cst_8 [1] : vector<8x128xf32> to vector<8xf32>
    %14 = vector.shape_cast %13 : vector<8xf32> to vector<8x1xf32>
    %15 = vector.broadcast %14 : vector<8x1xf32> to vector<8x128xf32>
    %16 = arith.subf %12, %15 : vector<8x128xf32>
    %17 = math.exp %16 : vector<8x128xf32>
    %cst_9 = arith.constant dense<0.000000e+00> : vector<8xf32>
    %18 = vector.multi_reduction <add>, %17, %cst_9 [1] : vector<8x128xf32> to vector<8xf32>
    %19 = vector.shape_cast %18 : vector<8xf32> to vector<8x1xf32>
    %20 = tpu.reciprocal %19 {approx = true} : vector<8x1xf32> -> vector<8x1xf32>
    %21 = vector.broadcast %20 : vector<8x1xf32> to vector<8x128xf32>
    %22 = arith.mulf %17, %21 : vector<8x128xf32>
    %23 = arith.subf %7, %9 : vector<8x128xf32>
    %24 = arith.mulf %22, %23 : vector<8x128xf32>
    %25 = arith.addf %9, %24 : vector<8x128xf32>
    %c0_10 = arith.constant 0 : index
    %c0_11 = arith.constant 0 : index
    %26 = vector.load %arg5[%c0_10, %c0_11] : memref<8x128xf32, #tpu.memory_space<vmem>>, vector<8x128xf32>
    tpu.vector_store %arg5[%c0_10, %c0_11], %25 {strides = array<i32>} : memref<8x128xf32, #tpu.memory_space<vmem>>, vector<8x128xf32>,
    return
  }
  func.func @transform_0(%arg0: i32) -> (i32, i32) {
    %c0_i32 = arith.constant 0 : i32
    %c0_i32_0 = arith.constant 0 : i32
    return %arg0, %c0_i32 : i32, i32
  }
  func.func @transform_1(%arg0: i32) -> (i32, i32) {
    %c0_i32 = arith.constant 0 : i32
    %c0_i32_0 = arith.constant 0 : i32
    return %arg0, %c0_i32 : i32, i32
  }
  func.func @transform_2(%arg0: i32) -> (i32, i32) {
    %c0_i32 = arith.constant 0 : i32
    %c0_i32_0 = arith.constant 0 : i32
    %c0_i32_1 = arith.constant 0 : i32
    return %c0_i32, %c0_i32_0 : i32, i32
  }
  func.func @transform_3(%arg0: i32) -> (i32, i32) {
    %c0_i32 = arith.constant 0 : i32
    %c0_i32_0 = arith.constant 0 : i32
    %c0_i32_1 = arith.constant 0 : i32
    return %c0_i32, %c0_i32_0 : i32, i32
  }
  func.func @transform_4(%arg0: i32) -> (i32, i32) {
    %c0_i32 = arith.constant 0 : i32
    %c0_i32_0 = arith.constant 0 : i32
    return %arg0, %c0_i32 : i32, i32
  }
}

</mosaic_0001>

<llo_original>
// kernel: tpu_custom_call.1
$region0: #{tpu_custom_call.1}
  #allocation0 [shape = 'u32[]', space=smem, size = 0x4, offset = 0x4, fixed_abs, tag = 'smem constant byte address 0x4 - core index']
  #allocation1 [shape = 'u32[144,128]{1,0:T(1,128)}', space=vmem, size = 0x12000, scoped, tag = 'internal scratch']
  %s0 = inlined_call_operand.hbm [shape: f32[8,32], index: 0, kind: input, shape index: {}]
  %s1 = inlined_call_operand.hbm [shape: f32[8,48], index: 1, kind: input, shape index: {}]
  %s2 = inlined_call_operand.hbm [shape: f32[32,256], index: 2, kind: input, shape index: {}]
  %s3 = inlined_call_operand.hbm [shape: f32[48,256], index: 3, kind: input, shape index: {}]
  %s4 = inlined_call_operand.hbm [shape: f32[8,128], index: 4, kind: output, shape index: {}]
  %s5 = sld [smem:[#allocation0]]
  $region42: #{tpu_custom_call.1} parent=0
    _
  %s7 = ssub.s32 1, %s5
  %s8 = scalar_select 0, %s7, %s5
  $region1: #{tpu_custom_call.1} parent=0
    #allocation2 [shape = 'u8[4096]{0}', space=vmem, size = 0x1000, scoped, tag = 'input window, operand 0, single buffered']
    #allocation3 [shape = 's32[1]{0}', space=sflag, size = 0x4, scoped, tag = 'scoped memory for tpu_custom_call.1']
    #allocation4 [shape = 's32[1]{0}', space=sflag, size = 0x4, scoped, tag = 'scoped memory for tpu_custom_call.1']
    #allocation5 [shape = 'u8[4096]{0}', space=vmem, size = 0x1000, scoped, tag = 'input window, operand 1, single buffered']
    #allocation6 [shape = 's32[1]{0}', space=sflag, size = 0x4, scoped, tag = 'scoped memory for tpu_custom_call.1']
    #allocation7 [shape = 'u8[32768]{0}', space=vmem, size = 0x8000, scoped, tag = 'input window, operand 2, single buffered']
    #allocation8 [shape = 'u8[49152]{0}', space=vmem, size = 0xc000, scoped, tag = 'input window, operand 3, single buffered']
    #allocation9 [shape = 's32[1]{0}', space=sflag, size = 0x4, scoped, tag = 'scoped memory for tpu_custom_call.1']
    #allocation10 [shape = 'u8[4096]{0}', space=vmem, size = 0x1000, scoped, tag = 'output window, operand 0, single buffered']
    %9 = vsyncpa [#allocation3], 0
    %10 = vsyncpa [#allocation6], 0
    %11 = vsyncpa [#allocation9], 0
    %12 = vsyncpa [#allocation4], 0
    // Predicated region
    $region2: #{tpu_custom_call.1} parent=1 // pred_check
      _
    $region3: #{tpu_custom_call.1} parent=1 // pred_check_branch
      %14 = sbr.rel (0) target = $region5
    $region4: #{tpu_custom_call.1} parent=1 // pred_region
      %s16 = ssub.s32 128, 128
      %17 = vsyncadd [#allocation3], %s16
      %s19 = sshll.u32 [#allocation2], 4
      %s20 = int_to_ptr.vmem [resolvable:$true] %s19
      %22 = dma.hbm_to_vmem [thread:$0]  %s0, 128, %s20, [#allocation3]
    $region5: #{tpu_custom_call.1} parent=1 // pred_fallthru
      _
    // Predicated region
    $region6: #{tpu_custom_call.1} parent=1 // pred_check
      _
    $region7: #{tpu_custom_call.1} parent=1 // pred_check_branch
      %24 = sbr.rel (0) target = $region9
    $region8: #{tpu_custom_call.1} parent=1 // pred_region
      %s26 = ssub.s32 128, 128
      %27 = vsyncadd [#allocation6], %s26
      %s29 = sshll.u32 [#allocation5], 4
      %s30 = int_to_ptr.vmem [resolvable:$true] %s29
      %32 = dma.hbm_to_vmem [thread:$0]  %s1, 128, %s30, [#allocation6]
    $region9: #{tpu_custom_call.1} parent=1 // pred_fallthru
      _
    // Predicated region
    $region10: #{tpu_custom_call.1} parent=1 // pred_check
      _
    $region11: #{tpu_custom_call.1} parent=1 // pred_check_branch
      %34 = sbr.rel (0) target = $region13
    $region12: #{tpu_custom_call.1} parent=1 // pred_region
      %s36 = ssub.s32 1024, 1024
      %37 = vsyncadd [#allocation6], %s36
      %s38 = sshll.u32 [#allocation7], 4
      %s39 = int_to_ptr.vmem [resolvable:$true] %s38
      %44 = dma.hbm_to_vmem [thread:$0]  %s2, 1024, %s39, [#allocation6], 256, 256, 16
    $region13: #{tpu_custom_call.1} parent=1 // pred_fallthru
      _
    // Predicated region
    $region14: #{tpu_custom_call.1} parent=1 // pred_check
      _
    $region15: #{tpu_custom_call.1} parent=1 // pred_check_branch
      %46 = sbr.rel (0) target = $region17
    $region16: #{tpu_custom_call.1} parent=1 // pred_region
      %s48 = ssub.s32 1536, 1536
      %49 = vsyncadd [#allocation9], %s48
      %s50 = sshll.u32 [#allocation8], 4
      %s51 = int_to_ptr.vmem [resolvable:$true] %s50
      %56 = dma.hbm_to_vmem [thread:$0]  %s3, 1536, %s51, [#allocation9], 256, 256, 16
    $region17: #{tpu_custom_call.1} parent=1 // pred_fallthru
      _
    // Predicated region
    $region18: #{tpu_custom_call.1} parent=1 // pred_check
      _
    $region19: #{tpu_custom_call.1} parent=1 // pred_check_branch
      %58 = sbr.rel (0) target = $region21
    $region20: #{tpu_custom_call.1} parent=1 // pred_region
      %59 = dma.done [#allocation3], 128
    $region21: #{tpu_custom_call.1} parent=1 // pred_fallthru
      _
    // Predicated region
    $region22: #{tpu_custom_call.1} parent=1 // pred_check
      _
    $region23: #{tpu_custom_call.1} parent=1 // pred_check_branch
      %61 = sbr.rel (0) target = $region25
    $region24: #{tpu_custom_call.1} parent=1 // pred_region
      %62 = dma.done [#allocation6], 128
    $region25: #{tpu_custom_call.1} parent=1 // pred_fallthru
      _
    // Predicated region
    $region26: #{tpu_custom_call.1} parent=1 // pred_check
      _
    $region27: #{tpu_custom_call.1} parent=1 // pred_check_branch
      %64 = sbr.rel (0) target = $region29
    $region28: #{tpu_custom_call.1} parent=1 // pred_region
      %65 = dma.done [#allocation6], 1024
    $region29: #{tpu_custom_call.1} parent=1 // pred_fallthru
      _
    // Predicated region
    $region30: #{tpu_custom_call.1} parent=1 // pred_check
      _
    $region31: #{tpu_custom_call.1} parent=1 // pred_check_branch
      %67 = sbr.rel (0) target = $region33
    $region32: #{tpu_custom_call.1} parent=1 // pred_region
      %68 = dma.done [#allocation9], 1536
    $region33: #{tpu_custom_call.1} parent=1 // pred_fallthru
      _
    %v69 = vld [vmem:[#allocation2] sm:$0xff]
    %v70 = vld [vmem:[#allocation7] sm:$0xff]
    %v71 = vld [vmem:[#allocation7 + $0x8] sm:$0xff]
    %v72 = vld [vmem:[#allocation7 + $0x10] sm:$0xff]
    %v73 = vld [vmem:[#allocation7 + $0x18] sm:$0xff]
    %v74 = vld [vmem:[#allocation7 + $0x20] sm:$0xff]
    %v75 = vld [vmem:[#allocation7 + $0x28] sm:$0xff]
    %v76 = vld [vmem:[#allocation7 + $0x30] sm:$0xff]
    %v77 = vld [vmem:[#allocation7 + $0x38] sm:$0xff]
    %vm78 = vcmask 261120
    %v80 = vsel %vm78, %v69, 0
    %82 = vmatprep.subr.mxu0 %v71
    %83 = vmatpush1.msra.mxu0 %v70
    %84 = vmatprep.subr.mxu0 %v73
    %85 = vmatpush1.msra.mxu0 %v72
    %86 = vmatprep.subr.mxu0 %v75
    %87 = vmatpush1.msra.mxu0 %v74
    %88 = vmatprep.subr.mxu0 %v77
    %89 = vmatpush1.msra.mxu0 %v76
    %90 = vmatprep.subr.mxu0 0.0
    %91 = vmatpush1.msra.mxu0 0.0
    %92 = vmatprep.subr.mxu0 0.0
    %93 = vmatpush1.msra.mxu0 0.0
    %94 = vmatprep.subr.mxu0 0.0
    %95 = vmatpush1.msra.mxu0 0.0
    %96 = vmatprep.subr.mxu0 0.0
    %97 = vmatpush1.msra.mxu0 0.0
    %98 = vmatprep.subr.mxu0 0.0
    %99 = vmatpush1.msra.mxu0 0.0
    %100 = vmatprep.subr.mxu0 0.0
    %101 = vmatpush1.msra.mxu0 0.0
    %102 = vmatprep.subr.mxu0 0.0
    %103 = vmatpush1.msra.mxu0 0.0
    %104 = vmatprep.subr.mxu0 0.0
    %105 = vmatpush1.msra.mxu0 0.0
    %106 = vmatprep.subr.mxu0 0.0
    %107 = vmatpush1.msra.mxu0 0.0
    %108 = vmatprep.subr.mxu0 0.0
    %109 = vmatpush1.msra.mxu0 0.0
    %110 = vmatprep.subr.mxu0 0.0
    %111 = vmatpush1.msra.mxu0 0.0
    %112 = vmatprep.subr.mxu0 0.0
    %113 = vmatpush1.msra.mxu0 0.0
    %114 = vmatprep.subr.mxu0 0.0
    %115 = vmatpush1.msra.mxu0 0.0
    %116 = vmatprep.subr.mxu0 0.0
    %117 = vmatpush1.msra.mxu0 0.0
    %118 = vmatprep.subr.mxu0 0.0
    %119 = vmatpush1.msra.mxu0 0.0
    %120 = vmatprep.subr.mxu0 0.0
    %121 = vmatpush1.msra.mxu0 0.0
    %122 = vmatprep.subr.mxu0 0.0
    %123 = vmatpush1.msra.mxu0 0.0
    %124 = vmatprep.subr.mxu0 0.0
    %125 = vmatpush1.msra.mxu0 0.0
    %126 = vmatprep.subr.mxu0 0.0
    %127 = vmatpush1.msra.mxu0 0.0
    %128 = vmatprep.subr.mxu0 0.0
    %129 = vmatpush1.msra.mxu0 0.0
    %130 = vmatprep.subr.mxu0 0.0
    %131 = vmatpush1.msra.mxu0 0.0
    %132 = vmatprep.subr.mxu0 0.0
    %133 = vmatpush1.msra.mxu0 0.0
    %134 = vmatprep.subr.mxu0 0.0
    %135 = vmatpush1.msra.mxu0 0.0
    %136 = vmatprep.subr.mxu0 0.0
    %137 = vmatpush1.msra.mxu0 0.0
    %138 = vmatprep.subr.mxu0 0.0
    %139 = vmatpush1.msra.mxu0 0.0
    %140 = vmatprep.subr.mxu0 0.0
    %141 = vmatpush1.msra.mxu0 0.0
    %142 = vmatprep.subr.mxu0 0.0
    %143 = vmatpush1.msra.mxu0 0.0
    %144 = vmatprep.subr.mxu0 0.0
    %145 = vmatpush1.msra.mxu0 0.0
    %146 = vmatprep.mubr.f32.mxu0 0.0
    %147 = vmatmul.mubr.f32.gmra.mrb[0].mxu0 %v80
    %v148 = vpop.f32.mrb[0].mxu0
    %v149 = vadd.f32 0.0, %v148
    %v150 = vpop.f32.mrb[0].mxu0
    %v151 = vadd.f32 0.0, %v150
    %152 = vdwg.mxu0
    %v153 = vld [vmem:[#allocation5] sm:$0xff]
    %v154 = vld [vmem:[#allocation8] sm:$0xff]
    %v155 = vld [vmem:[#allocation8 + $0x8] sm:$0xff]
    %v156 = vld [vmem:[#allocation8 + $0x10] sm:$0xff]
    %v157 = vld [vmem:[#allocation8 + $0x18] sm:$0xff]
    %v158 = vld [vmem:[#allocation8 + $0x20] sm:$0xff]
    %v159 = vld [vmem:[#allocation8 + $0x28] sm:$0xff]
    %v160 = vld [vmem:[#allocation8 + $0x30] sm:$0xff]
    %v161 = vld [vmem:[#allocation8 + $0x38] sm:$0xff]
    %v162 = vld [vmem:[#allocation8 + $0x40] sm:$0xff]
    %v163 = vld [vmem:[#allocation8 + $0x48] sm:$0xff]
    %v164 = vld [vmem:[#allocation8 + $0x50] sm:$0xff]
    %v165 = vld [vmem:[#allocation8 + $0x58] sm:$0xff]
    %vm166 = vcmask 392192
    %v168 = vsel %vm166, %v153, 0
    %170 = vmatprep.subr.mxu0 %v155
    %171 = vmatpush1.msra.mxu0 %v154
    %172 = vmatprep.subr.mxu0 %v157
    %173 = vmatpush1.msra.mxu0 %v156
    %174 = vmatprep.subr.mxu0 %v159
    %175 = vmatpush1.msra.mxu0 %v158
    %176 = vmatprep.subr.mxu0 %v161
    %177 = vmatpush1.msra.mxu0 %v160
    %178 = vmatprep.subr.mxu0 %v163
    %179 = vmatpush1.msra.mxu0 %v162
    %180 = vmatprep.subr.mxu0 %v165
    %181 = vmatpush1.msra.mxu0 %v164
    %182 = vmatprep.subr.mxu0 0.0
    %183 = vmatpush1.msra.mxu0 0.0
    %184 = vmatprep.subr.mxu0 0.0
    %185 = vmatpush1.msra.mxu0 0.0
    %186 = vmatprep.subr.mxu0 0.0
    %187 = vmatpush1.msra.mxu0 0.0
    %188 = vmatprep.subr.mxu0 0.0
    %189 = vmatpush1.msra.mxu0 0.0
    %190 = vmatprep.subr.mxu0 0.0
    %191 = vmatpush1.msra.mxu0 0.0
    %192 = vmatprep.subr.mxu0 0.0
    %193 = vmatpush1.msra.mxu0 0.0
    %194 = vmatprep.subr.mxu0 0.0
    %195 = vmatpush1.msra.mxu0 0.0
    %196 = vmatprep.subr.mxu0 0.0
    %197 = vmatpush1.msra.mxu0 0.0
    %198 = vmatprep.subr.mxu0 0.0
    %199 = vmatpush1.msra.mxu0 0.0
    %200 = vmatprep.subr.mxu0 0.0
    %201 = vmatpush1.msra.mxu0 0.0
    %202 = vmatprep.subr.mxu0 0.0
    %203 = vmatpush1.msra.mxu0 0.0
    %204 = vmatprep.subr.mxu0 0.0
    %205 = vmatpush1.msra.mxu0 0.0
    %206 = vmatprep.subr.mxu0 0.0
    %207 = vmatpush1.msra.mxu0 0.0
    %208 = vmatprep.subr.mxu0 0.0
    %209 = vmatpush1.msra.mxu0 0.0
    %210 = vmatprep.subr.mxu0 0.0
    %211 = vmatpush1.msra.mxu0 0.0
    %212 = vmatprep.subr.mxu0 0.0
    %213 = vmatpush1.msra.mxu0 0.0
    %214 = vmatprep.subr.mxu0 0.0
    %215 = vmatpush1.msra.mxu0 0.0
    %216 = vmatprep.subr.mxu0 0.0
    %217 = vmatpush1.msra.mxu0 0.0
    %218 = vmatprep.subr.mxu0 0.0
    %219 = vmatpush1.msra.mxu0 0.0
    %220 = vmatprep.subr.mxu0 0.0
    %221 = vmatpush1.msra.mxu0 0.0
    %222 = vmatprep.subr.mxu0 0.0
    %223 = vmatpush1.msra.mxu0 0.0
    %224 = vmatprep.subr.mxu0 0.0
    %225 = vmatpush1.msra.mxu0 0.0
    %226 = vmatprep.subr.mxu0 0.0
    %227 = vmatpush1.msra.mxu0 0.0
    %228 = vmatprep.subr.mxu0 0.0
    %229 = vmatpush1.msra.mxu0 0.0
    %230 = vmatprep.subr.mxu0 0.0
    %231 = vmatpush1.msra.mxu0 0.0
    %232 = vmatprep.subr.mxu0 0.0
    %233 = vmatpush1.msra.mxu0 0.0
    %234 = vmatprep.mubr.f32.mxu0 0.0
    %235 = vmatmul.mubr.f32.gmra.mrb[0].mxu0 %v168
    %v236 = vpop.f32.mrb[0].mxu0
    %v237 = vadd.f32 0.0, %v236
    %v238 = vpop.f32.mrb[0].mxu0
    %v239 = vadd.f32 0.0, %v238
    %240 = vdwg.mxu0
    %v241 = vtanh.pop %v149
    %v242 = vtanh.pop %v237
    %v243 = vadd.f32 %v151, %v239
    %244 = vmax.xlane.f32.xlu0 %v243
    %v245 = vpop.xlane.xlu0 %244
    %v246 = vsub.f32 %v243, %v245
    %v247 = vmul.f32 %v246, 1.442695
    %v248 = vpow.pop %v247
    %249 = vadd.xlane.f32.xlu0 %v248
    %v250 = vpop.xlane.xlu0 %249
    %v251 = vrcp.pop %v250
    %v252 = vmul.f32 %v248, %v251
    %v253 = vsub.f32 %v241, %v242
    %v254 = vmul.f32 %v252, %v253
    %v255 = vadd.f32 %v242, %v254
    %256 = vst [vmem:[#allocation10] sm:$0xff] %v255
    // Predicated region
    $region34: #{tpu_custom_call.1} parent=1 // pred_check
      _
    $region35: #{tpu_custom_call.1} parent=1 // pred_check_branch
      %258 = sbr.rel (0) target = $region37
    $region36: #{tpu_custom_call.1} parent=1 // pred_region
      %s260 = ssub.s32 128, 128
      %261 = vsyncadd [#allocation4], %s260
      %s263 = sshll.u32 [#allocation10], 4
      %s264 = int_to_ptr.vmem [resolvable:$true] %s263
      %266 = dma.vmem_to_hbm [thread:$0]  %s264, 128, %s4, [#allocation4]
    $region37: #{tpu_custom_call.1} parent=1 // pred_fallthru
      _
    // Predicated region
    $region38: #{tpu_custom_call.1} parent=1 // pred_check
      _
    $region39: #{tpu_custom_call.1} parent=1 // pred_check_branch
      %268 = sbr.rel (0) target = $region41
    $region40: #{tpu_custom_call.1} parent=1 // pred_region
      %269 = dma.done [#allocation4], 128
    $region41: #{tpu_custom_call.1} parent=1 // pred_fallthru
      _
    %270 = vsyncpa [#allocation3], 1
    %271 = vsyncpa [#allocation6], 1
    %272 = vsyncpa [#allocation9], 1
    %273 = vsyncpa [#allocation4], 1

</llo_original>
